<compile_context>
chip_gen: v6e
topology: v6e:2x2x1
jax: 0.10.0
libtpu: 0.0.40
codegen_flags: <defaults>
</compile_context>

<pallas_src>
import functools
import math

import jax
import jax.numpy as jnp
from jax.experimental import pallas as pl
from jax.experimental.pallas import tpu as pltpu

_LANE = 128
_LOG_SQRT_2PI = math.log(math.sqrt(2.0 * math.pi))


def _cdiv(a, b):
    return -(-a // b)


def _round_up(a, b):
    return _cdiv(a, b) * b


def _sublane_multiple(*dtypes):
    """Packed min-tile sublane count: 8 (4-byte), 16 (2-byte), 32 (1-byte)."""
    mult = 8
    for dt in dtypes:
        itemsize = jnp.dtype(dt).itemsize
        mult = max(mult, {4: 8, 2: 16, 1: 32}.get(itemsize, 8))
    return mult


def _to_lane_dense(v):
    """(N,) -> (cdiv(N,128), 128); pads at most 127 elements (free if N%128==0)."""
    n = v.shape[0]
    rows = _cdiv(n, _LANE)
    pad = rows * _LANE - n
    if pad:
        v = jnp.pad(v, (0, pad))
    return v.reshape(rows, _LANE)


# ---------------------------------------------------------------------------
# Kernels
# ---------------------------------------------------------------------------
def _gaussian_sum_kernel(mu_ref, si_ref, tgt_ref, out_ref, acc_ref, *,
                         n_valid, tile_r, tiles_per_chunk):
    """Partial sums.  grid = (num_chunks, tiles_per_chunk).

    mu/si/tgt refs: (tile_r, 128) lane-dense input tiles (any float dtype).
    out_ref       : (1, 8, 128) per-chunk raw accumulator tile.
    acc_ref       : (8, 128) f32 VMEM running sums (vreg-wise accumulation).
    """
    p = pl.program_id(0)
    t = pl.program_id(1)

    @pl.when(t == 0)
    def _():
        acc_ref[...] = jnp.zeros_like(acc_ref)

    # Cast in-kernel (bf16 inputs stay bf16 in HBM; f32 only inside VMEM).
    mu = mu_ref[...].astype(jnp.float32)
    si = jnp.maximum(si_ref[...].astype(jnp.float32), jnp.float32(0.1))  # clamp BEFORE divide
    tgt = tgt_ref[...].astype(jnp.float32)

    z = (tgt - mu) / si
    vals = jnp.float32(0.5) * z * z + jnp.log(si)   # log(sqrt(2pi)) hoisted to wrapper

    # Mask the <128 pad elements and any ragged/clamped boundary block.
    # Two-term row/lane mask avoids 32-bit flat-index overflow.
    row_off = (p * tiles_per_chunk + t) * tile_r
    rows_g = jax.lax.broadcasted_iota(jnp.int32, vals.shape, 0) + row_off
    lanes = jax.lax.broadcasted_iota(jnp.int32, vals.shape, 1)
    full_rows = n_valid // _LANE
    rem = n_valid % _LANE
    mask = (rows_g < full_rows) | ((rows_g == full_rows) & (lanes < rem))
    vals = jnp.where(mask, vals, jnp.float32(0.0))

    # vreg-wise accumulation; no XLU cross-sublane/lane reduce inside the kernel.
    acc_ref[...] += vals.reshape(-1, 8, _LANE).sum(axis=0)

    @pl.when(t == tiles_per_chunk - 1)
    def _():
        out_ref[...] = acc_ref[...].reshape(out_ref.shape)


def _gaussian_values_kernel(mu_ref, si_ref, tgt_ref, val_ref):
    """Unreduced per-element values, lane-dense in and out."""
    mu = mu_ref[...].astype(jnp.float32)
    si = jnp.maximum(si_ref[...].astype(jnp.float32), jnp.float32(0.1))
    tgt = tgt_ref[...].astype(jnp.float32)
    z = (tgt - mu) / si
    val_ref[...] = (jnp.float32(0.5) * z * z + jnp.log(si)
                    + jnp.float32(_LOG_SQRT_2PI))


# ---------------------------------------------------------------------------
# Wrappers
# ---------------------------------------------------------------------------
def gaussian_loss_parts(mu, si, tgt, *, size_average=True, reduce=True,
                        tile_rows_max=4096, num_chunks=1):
    """Fast path: pre-split (N,) mu / sigma / target arrays (f32 or bf16)."""
    n = mu.shape[0]
    if n == 0:
        if not reduce:
            return jnp.zeros((0, 1), jnp.float32)     # matches torch (0,1) output
        # torch.mean of empty -> NaN, torch.sum of empty -> 0.
        return jnp.float32(float("nan")) if size_average else jnp.float32(0.0)

    sub = _sublane_multiple(mu.dtype, si.dtype, tgt.dtype)
    rows = _cdiv(n, _LANE)
    tile_r = _round_up(min(max(int(tile_rows_max), sub), _round_up(rows, sub)), sub)
    n_tiles = _cdiv(rows, tile_r)

    mu2, si2, tgt2 = _to_lane_dense(mu), _to_lane_dense(si), _to_lane_dense(tgt)

    tile_in_bytes = sum(tile_r * _LANE * jnp.dtype(v.dtype).itemsize
                        for v in (mu, si, tgt))

    if not reduce:
        vmem_bytes = 2 * tile_in_bytes + 2 * tile_r * _LANE * 4 + (8 << 20)
        slab = pl.pallas_call(
            _gaussian_values_kernel,
            out_shape=jax.ShapeDtypeStruct((rows, _LANE), jnp.float32),
            grid=(n_tiles,),
            in_specs=[pl.BlockSpec((tile_r, _LANE), lambda i: (i, 0))] * 3,
            out_specs=pl.BlockSpec((tile_r, _LANE), lambda i: (i, 0)),
            compiler_params=pltpu.CompilerParams(
                dimension_semantics=("parallel",),
                vmem_limit_bytes=int(vmem_bytes)),
        )(mu2, si2, tgt2)
        if n == rows * _LANE:
            return slab.reshape(n, 1)              # metadata-only reshape, free
        # Exact (N,1) module semantics require trimming the <=127 pad lanes.
        return slab.reshape(-1)[:n].reshape(n, 1)

    # reduce=True: (num_chunks "parallel") x (tiles "arbitrary") accumulator grid.
    n_chunks = max(1, min(int(num_chunks), n_tiles))
    tiles_per_chunk = _cdiv(n_tiles, n_chunks)
    last_tile = n_tiles - 1

    kernel = functools.partial(_gaussian_sum_kernel, n_valid=n,
                               tile_r=tile_r, tiles_per_chunk=tiles_per_chunk)
    # Clamp so chunk-padding steps re-read the last block (fully masked anyway).
    in_map = lambda p, t: (jnp.minimum(p * tiles_per_chunk + t, last_tile), 0)

    vmem_bytes = 2 * tile_in_bytes + (8 << 20)
    partials = pl.pallas_call(
        kernel,
        out_shape=jax.ShapeDtypeStruct((n_chunks, 8, _LANE), jnp.float32),
        grid=(n_chunks, tiles_per_chunk),
        in_specs=[pl.BlockSpec((tile_r, _LANE), in_map)] * 3,
        out_specs=pl.BlockSpec((1, 8, _LANE), lambda p, t: (p, 0, 0)),
        scratch_shapes=[pltpu.VMEM((8, _LANE), jnp.float32)],
        compiler_params=pltpu.CompilerParams(
            dimension_semantics=("parallel", "arbitrary"),
            vmem_limit_bytes=int(vmem_bytes)),
    )(mu2, si2, tgt2)

    total = jnp.sum(partials)                       # tiny (n_chunks*1024) reduce
    if size_average:
        return total / jnp.float32(n) + jnp.float32(_LOG_SQRT_2PI)
    return total + jnp.float32(n) * jnp.float32(_LOG_SQRT_2PI)


def gaussian_loss(outputs, targets, *, size_average=True, reduce=True,
                  tile_rows_max=4096, num_chunks=1):
    """Module-interface wrapper: outputs (N, 2) [mu, sigma], targets (N, 1) or (N,)."""
    n = outputs.shape[0]
    if n == 0:
        return gaussian_loss_parts(outputs[:, 0], outputs[:, 0], outputs[:, 0],
                                   size_average=size_average, reduce=reduce)
    # Unavoidable de-interleave of the module's (N,2) layout; callers holding
    # separate mu/sigma arrays should use gaussian_loss_parts() directly.
    mu = outputs[:, 0]
    si = outputs[:, 1]
    tgt = targets.reshape(-1)
    return gaussian_loss_parts(mu, si, tgt, size_average=size_average,
                               reduce=reduce, tile_rows_max=tile_rows_max,
                               num_chunks=num_chunks)


# ---------------------------------------------------------------------------
# Pure-JAX references for validation.
# ---------------------------------------------------------------------------
def _reference_values(outputs, targets):
    outputs = outputs.astype(jnp.float32)
    targets = targets.astype(jnp.float32).reshape(-1, 1)
    mu = outputs[:, 0:1]
    si = jnp.maximum(outputs[:, 1:2], 0.1)
    norm = targets - mu
    return (norm / si) ** 2 / 2.0 + jnp.log(si * math.sqrt(2.0 * math.pi))


def _reference_loss(outputs, targets, *, size_average=True):
    values = _reference_values(outputs, targets)
    return jnp.mean(values) if size_average else jnp.sum(values)


if __name__ == "__main__":
    key = jax.random.PRNGKey(0)
    k1, k2, k3, k4 = jax.random.split(key, 4)

    # --- small test at the module's natural (N, 2) / (N, 1) interface ---
    N = 8
    outputs = jax.random.normal(k1, (N, 2), dtype=jnp.float32)
    outputs = outputs.at[:, 0].add(10.0)                      # mu ~ distances
    outputs = outputs.at[:, 1].set(jnp.abs(outputs[:, 1]))    # sigma-ish (>0)
    targets = 10.0 + jax.random.normal(k2, (N, 1), dtype=jnp.float32)

    loss = jax.block_until_ready(gaussian_loss(outputs, targets))
    ref = _reference_loss(outputs, targets, size_average=True)
    assert jnp.allclose(loss, ref, rtol=1e-5, atol=1e-5), (loss, ref)

    vals = jax.block_until_ready(gaussian_loss(outputs, targets, reduce=False))
    ref_vals = _reference_values(outputs, targets)
    assert vals.shape == (N, 1)
    assert jnp.allclose(vals, ref_vals, rtol=1e-5, atol=1e-5)

    # --- multi-tile grid, ragged last block, tail masking, 2-chunk split ---
    N2 = 4000
    outputs2 = jax.random.normal(k3, (N2, 2), dtype=jnp.float32)
    outputs2 = outputs2.at[:, 0].add(10.0)
    outputs2 = outputs2.at[:, 1].set(jnp.abs(outputs2[:, 1]))
    targets2 = 10.0 + jax.random.normal(k4, (N2, 1), dtype=jnp.float32)

    loss2 = jax.block_until_ready(
        gaussian_loss(outputs2, targets2, size_average=True,
                      tile_rows_max=8, num_chunks=2))
    ref2 = _reference_loss(outputs2, targets2, size_average=True)
    assert jnp.allclose(loss2, ref2, rtol=1e-4, atol=1e-4), (loss2, ref2)

    sum2 = jax.block_until_ready(
        gaussian_loss(outputs2, targets2, size_average=False, tile_rows_max=8))
    ref_sum2 = _reference_loss(outputs2, targets2, size_average=False)
    assert jnp.allclose(sum2, ref_sum2, rtol=1e-4, atol=1e-2), (sum2, ref_sum2)

    vals2 = jax.block_until_ready(
        gaussian_loss(outputs2, targets2, reduce=False, tile_rows_max=8))
    assert vals2.shape == (N2, 1)
    assert jnp.allclose(vals2, _reference_values(outputs2, targets2),
                        rtol=1e-5, atol=1e-5)

    # --- bf16 inputs exercise the (16, 128) packed-tile rounding path ---
    outputs_bf = outputs2.astype(jnp.bfloat16)
    targets_bf = targets2.astype(jnp.bfloat16)
    loss_bf = jax.block_until_ready(
        gaussian_loss(outputs_bf, targets_bf, size_average=True, tile_rows_max=8))
    ref_bf = _reference_loss(outputs_bf, targets_bf, size_average=True)
    assert jnp.allclose(loss_bf, ref_bf, rtol=1e-4, atol=1e-4), (loss_bf, ref_bf)

    print("KERNEL_OK")
</pallas_src>

<mosaic_0001>
module attributes {stable_mosaic.version = 11 : i64} {
  func.func @_gaussian_sum_kernel(%arg0: i32, %arg1: i32, %arg2: memref<8x128xf32, #tpu.memory_space<vmem>>, %arg3: memref<8x128xf32, #tpu.memory_space<vmem>>, %arg4: memref<8x128xf32, #tpu.memory_space<vmem>>, %arg5: memref<1x8x128xf32, #tpu.memory_space<vmem>>, %arg6: memref<8x128xf32, #tpu.memory_space<vmem>>) attributes {dimension_semantics = [#tpu.dimension_semantics<parallel>, #tpu.dimension_semantics<arbitrary>], iteration_bounds = array<i64: 1, 1>, scalar_prefetch = 0 : i64, scratch_operands = 1 : i64, tpu.core_type = #tpu.core_type<tc>, window_params = [{transform_indices = @transform_0, window_bounds = array<i64: 8, 128>}, {transform_indices = @transform_1, window_bounds = array<i64: 8, 128>}, {transform_indices = @transform_2, window_bounds = array<i64: 8, 128>}, {transform_indices = @transform_3, window_bounds = array<i64: 1, 8, 128>}]} {
    %c0_i32 = arith.constant 0 : i32
    %0 = arith.cmpi eq, %arg1, %c0_i32 : i32
    %1 = arith.extui %0 : i1 to i32
    %c0_i32_0 = arith.constant 0 : i32
    %2 = arith.cmpi ne, %1, %c0_i32_0 : i32
    scf.if %2 {
      %cst_18 = arith.constant 0.000000e+00 : f32
      %40 = vector.broadcast %cst_18 : f32 to vector<8x128xf32>
      %c0_19 = arith.constant 0 : index
      %c0_20 = arith.constant 0 : index
      %41 = vector.load %arg6[%c0_19, %c0_20] : memref<8x128xf32, #tpu.memory_space<vmem>>, vector<8x128xf32>
      tpu.vector_store %arg6[%c0_19, %c0_20], %40 {strides = array<i32>} : memref<8x128xf32, #tpu.memory_space<vmem>>, vector<8x128xf32>,
    } else {
    }
    %c0 = arith.constant 0 : index
    %c0_1 = arith.constant 0 : index
    %3 = vector.load %arg2[%c0, %c0_1] : memref<8x128xf32, #tpu.memory_space<vmem>>, vector<8x128xf32>
    %c0_2 = arith.constant 0 : index
    %c0_3 = arith.constant 0 : index
    %4 = vector.load %arg3[%c0_2, %c0_3] : memref<8x128xf32, #tpu.memory_space<vmem>>, vector<8x128xf32>
    %cst = arith.constant 1.000000e-01 : f32
    %5 = vector.broadcast %cst : f32 to vector<8x128xf32>
    %6 = arith.maximumf %4, %5 : vector<8x128xf32>
    %c0_4 = arith.constant 0 : index
    %c0_5 = arith.constant 0 : index
    %7 = vector.load %arg4[%c0_4, %c0_5] : memref<8x128xf32, #tpu.memory_space<vmem>>, vector<8x128xf32>
    %8 = arith.subf %7, %3 : vector<8x128xf32>
    %9 = arith.divf %8, %6 : vector<8x128xf32>
    %cst_6 = arith.constant 5.000000e-01 : f32
    %10 = vector.broadcast %cst_6 : f32 to vector<8x128xf32>
    %11 = arith.mulf %10, %9 : vector<8x128xf32>
    %12 = arith.mulf %11, %9 : vector<8x128xf32>
    %13 = math.log %6 : vector<8x128xf32>
    %14 = arith.addf %12, %13 : vector<8x128xf32>
    %c1_i32 = arith.constant 1 : i32
    %15 = arith.muli %arg0, %c1_i32 : i32
    %16 = arith.addi %15, %arg1 : i32
    %c8_i32 = arith.constant 8 : i32
    %17 = arith.muli %16, %c8_i32 : i32
    %18 = tpu.iota {dimensions = array<i32: 0>} : vector<8x128xi32>
    %19 = vector.broadcast %17 : i32 to vector<8x128xi32>
    %20 = arith.addi %18, %19 : vector<8x128xi32>
    %21 = tpu.iota {dimensions = array<i32: 1>} : vector<8x128xi32>
    %c0_i32_7 = arith.constant 0 : i32
    %22 = vector.broadcast %c0_i32_7 : i32 to vector<8x128xi32>
    %23 = arith.cmpi slt, %20, %22 : vector<8x128xi32>
    %c0_i32_8 = arith.constant 0 : i32
    %24 = vector.broadcast %c0_i32_8 : i32 to vector<8x128xi32>
    %25 = arith.cmpi eq, %20, %24 : vector<8x128xi32>
    %c8_i32_9 = arith.constant 8 : i32
    %26 = vector.broadcast %c8_i32_9 : i32 to vector<8x128xi32>
    %27 = arith.cmpi slt, %21, %26 : vector<8x128xi32>
    %28 = arith.andi %25, %27 : vector<8x128xi1>
    %29 = arith.ori %23, %28 : vector<8x128xi1>
    %cst_10 = arith.constant 0.000000e+00 : f32
    %30 = vector.broadcast %cst_10 : f32 to vector<8x128xf32>
    %31 = arith.select %29, %14, %30 : vector<8x128xi1>, vector<8x128xf32>
    %c0_11 = arith.constant 0 : index
    %c0_12 = arith.constant 0 : index
    %32 = vector.load %arg6[%c0_11, %c0_12] : memref<8x128xf32, #tpu.memory_space<vmem>>, vector<8x128xf32>
    %33 = vector.shape_cast %31 : vector<8x128xf32> to vector<1x8x128xf32>
    %cst_13 = arith.constant dense<0.000000e+00> : vector<8x128xf32>
    %34 = vector.multi_reduction <add>, %33, %cst_13 [0] : vector<1x8x128xf32> to vector<8x128xf32>
    %35 = arith.addf %32, %34 : vector<8x128xf32>
    %c0_14 = arith.constant 0 : index
    %c0_15 = arith.constant 0 : index
    %36 = vector.load %arg6[%c0_14, %c0_15] : memref<8x128xf32, #tpu.memory_space<vmem>>, vector<8x128xf32>
    tpu.vector_store %arg6[%c0_14, %c0_15], %35 {strides = array<i32>} : memref<8x128xf32, #tpu.memory_space<vmem>>, vector<8x128xf32>,
    %c0_i32_16 = arith.constant 0 : i32
    %37 = arith.cmpi eq, %arg1, %c0_i32_16 : i32
    %38 = arith.extui %37 : i1 to i32
    %c0_i32_17 = arith.constant 0 : i32
    %39 = arith.cmpi ne, %38, %c0_i32_17 : i32
    scf.if %39 {
      %c0_18 = arith.constant 0 : index
      %c0_19 = arith.constant 0 : index
      %40 = vector.load %arg6[%c0_18, %c0_19] : memref<8x128xf32, #tpu.memory_space<vmem>>, vector<8x128xf32>
      %41 = vector.shape_cast %40 : vector<8x128xf32> to vector<1x8x128xf32>
      %c0_20 = arith.constant 0 : index
      %c0_21 = arith.constant 0 : index
      %c0_22 = arith.constant 0 : index
      %42 = vector.load %arg5[%c0_20, %c0_21, %c0_22] : memref<1x8x128xf32, #tpu.memory_space<vmem>>, vector<1x8x128xf32>
      tpu.vector_store %arg5[%c0_20, %c0_21, %c0_22], %41 {strides = array<i32>} : memref<1x8x128xf32, #tpu.memory_space<vmem>>, vector<1x8x128xf32>,
    } else {
    }
    return
  }
  func.func @transform_0(%arg0: i32, %arg1: i32) -> (i32, i32) {
    %c1_i32 = arith.constant 1 : i32
    %0 = arith.muli %arg0, %c1_i32 : i32
    %1 = arith.addi %0, %arg1 : i32
    %c0_i32 = arith.constant 0 : i32
    %2 = arith.minsi %1, %c0_i32 : i32
    %c0_i32_0 = arith.constant 0 : i32
    %c0_i32_1 = arith.constant 0 : i32
    return %2, %c0_i32_0 : i32, i32
  }
  func.func @transform_1(%arg0: i32, %arg1: i32) -> (i32, i32) {
    %c1_i32 = arith.constant 1 : i32
    %0 = arith.muli %arg0, %c1_i32 : i32
    %1 = arith.addi %0, %arg1 : i32
    %c0_i32 = arith.constant 0 : i32
    %2 = arith.minsi %1, %c0_i32 : i32
    %c0_i32_0 = arith.constant 0 : i32
    %c0_i32_1 = arith.constant 0 : i32
    return %2, %c0_i32_0 : i32, i32
  }
  func.func @transform_2(%arg0: i32, %arg1: i32) -> (i32, i32) {
    %c1_i32 = arith.constant 1 : i32
    %0 = arith.muli %arg0, %c1_i32 : i32
    %1 = arith.addi %0, %arg1 : i32
    %c0_i32 = arith.constant 0 : i32
    %2 = arith.minsi %1, %c0_i32 : i32
    %c0_i32_0 = arith.constant 0 : i32
    %c0_i32_1 = arith.constant 0 : i32
    return %2, %c0_i32_0 : i32, i32
  }
  func.func @transform_3(%arg0: i32, %arg1: i32) -> (i32, i32, i32) {
    %c0_i32 = arith.constant 0 : i32
    %c0_i32_0 = arith.constant 0 : i32
    %c0_i32_1 = arith.constant 0 : i32
    return %arg0, %c0_i32, %c0_i32_0 : i32, i32, i32
  }
}

</mosaic_0001>

<llo_original>
// kernel: tpu_custom_call.1
$region0: #{tpu_custom_call.1}
  #allocation0 [shape = 'u32[]', space=smem, size = 0x4, offset = 0x4, fixed_abs, tag = 'smem constant byte address 0x4 - core index']
  #allocation1 [shape = 'u32[144,128]{1,0:T(1,128)}', space=vmem, size = 0x12000, scoped, tag = 'internal scratch']
  #allocation2 [shape = 'f32[8,128]{1,0:T(8,128)}', space=vmem, size = 0x1000, scoped, tag = 'scratch operand']
  %s0 = inlined_call_operand.hbm [shape: f32[1,128], index: 0, kind: input, shape index: {}]
  %s1 = inlined_call_operand.vmem [shape: f32[1,128], index: 1, kind: input, shape index: {}]
  %s2 = inlined_call_operand.vmem [shape: f32[1,128], index: 2, kind: input, shape index: {}]
  %s3 = inlined_call_operand.hbm [shape: f32[1,8,128], index: 3, kind: output, shape index: {}]
  %s4 = sld [smem:[#allocation0]]
  $region34: #{tpu_custom_call.1} parent=0
    _
  %s6 = ssub.s32 1, %s4
  %s7 = scalar_select 0, %s6, %s4
  $region1: #{tpu_custom_call.1} parent=0
    #allocation3 [shape = 'u8[4096]{0}', space=vmem, size = 0x1000, scoped, tag = 'input window, operand 0, single buffered']
    #allocation4 [shape = 's32[1]{0}', space=sflag, size = 0x4, scoped, tag = 'scoped memory for tpu_custom_call.1']
    #allocation5 [shape = 's32[1]{0}', space=sflag, size = 0x4, scoped, tag = 'scoped memory for tpu_custom_call.1']
    #allocation6 [shape = 'u8[4096]{0}', space=vmem, size = 0x1000, scoped, tag = 'output window, operand 0, single buffered']
    %8 = vsyncpa [#allocation4], 0
    %9 = vsyncpa [#allocation5], 0
    // Predicated region
    $region2: #{tpu_custom_call.1} parent=1 // pred_check
      _
    $region3: #{tpu_custom_call.1} parent=1 // pred_check_branch
      %11 = sbr.rel (0) target = $region5
    $region4: #{tpu_custom_call.1} parent=1 // pred_region
      %s12 = sadd.s32 0, 0
      %p13 = scmp.lt.s32.totalorder %s12, 0
      %s14 = scalar_select %p13, %s12, 0
      %s15 = smul.u32 8, %s14
      %s16 = ssub.s32 1, %s15
      %s17 = smul.u32 16, %s16
      %s19 = ssub.s32 128, %s17
      %20 = vsyncadd [#allocation4], %s19
      %p21 = scmp.ne.s32.totalorder 0, %s17
      %s22 = smul.addr %s15, 16
      %s23 = scalar_lea.hbm %s0, %s22
      %s24 = sshll.u32 [#allocation3], 4
      %s25 = int_to_ptr.vmem [resolvable:$true] %s24
      %s26 = sshll.u32 %s16, 4
      %30 = dma.hbm_to_vmem [thread:$0]  (%p21), %s23, %s26, %s25, [#allocation4], 16, 16, 1
    $region5: #{tpu_custom_call.1} parent=1 // pred_fallthru
      _
    // Predicated region
    $region6: #{tpu_custom_call.1} parent=1 // pred_check
      _
    $region7: #{tpu_custom_call.1} parent=1 // pred_check_branch
      %32 = sbr.rel (0) target = $region9
    $region8: #{tpu_custom_call.1} parent=1 // pred_region
      %s33 = sadd.s32 0, 0
      %p34 = scmp.lt.s32.totalorder %s33, 0
      %s35 = scalar_select %p34, %s33, 0
      %s36 = smul.u32 8, %s35
      %s37 = ssub.s32 1, %s36
      %s38 = smul.u32 16, %s37
      %p39 = scmp.lt.s32.totalorder %s36, 0
      %s40 = scalar_select %p39, %s36, 0
      %s41 = scalar_lea.vmem %s1, %s40
      %s42 = sadd.s32 0, 0
      %p43 = scmp.lt.s32.totalorder %s42, 0
      %s44 = scalar_select %p43, %s42, 0
      %s45 = smul.u32 8, %s44
      %s46 = ssub.s32 1, %s45
      %s47 = smul.u32 16, %s46
    $region9: #{tpu_custom_call.1} parent=1 // pred_fallthru
      _
    // Predicated region
    $region10: #{tpu_custom_call.1} parent=1 // pred_check
      _
    $region11: #{tpu_custom_call.1} parent=1 // pred_check_branch
      %49 = sbr.rel (0) target = $region13
    $region12: #{tpu_custom_call.1} parent=1 // pred_region
      %s50 = sadd.s32 0, 0
      %p51 = scmp.lt.s32.totalorder %s50, 0
      %s52 = scalar_select %p51, %s50, 0
      %s53 = smul.u32 8, %s52
      %s54 = ssub.s32 1, %s53
      %s55 = smul.u32 16, %s54
      %p56 = scmp.lt.s32.totalorder %s53, 0
      %s57 = scalar_select %p56, %s53, 0
      %s58 = scalar_lea.vmem %s2, %s57
      %s59 = sadd.s32 0, 0
      %p60 = scmp.lt.s32.totalorder %s59, 0
      %s61 = scalar_select %p60, %s59, 0
      %s62 = smul.u32 8, %s61
      %s63 = ssub.s32 1, %s62
      %s64 = smul.u32 16, %s63
    $region13: #{tpu_custom_call.1} parent=1 // pred_fallthru
      _
    // Predicated region
    $region14: #{tpu_custom_call.1} parent=1 // pred_check
      _
    $region15: #{tpu_custom_call.1} parent=1 // pred_check_branch
      %66 = sbr.rel (0) target = $region17
    $region16: #{tpu_custom_call.1} parent=1 // pred_region
      %67 = dma.done [#allocation4], 128
    $region17: #{tpu_custom_call.1} parent=1 // pred_fallthru
      _
    %s68 = sadd.s32 0, 0
    %p69 = scmp.lt.s32.totalorder %s68, 0
    %s70 = scalar_select %p69, %s68, 0
    %s71 = smul.u32 8, %s70
    %s72 = ssub.s32 1, %s71
    %s73 = smul.u32 16, %s72
    %p74 = scmp.lt.s32.totalorder %s71, 0
    %s75 = scalar_select %p74, %s71, 0
    %s76 = scalar_lea.vmem %s1, %s75
    %s77 = sadd.s32 0, 0
    %p78 = scmp.lt.s32.totalorder %s77, 0
    %s79 = scalar_select %p78, %s77, 0
    %s80 = smul.u32 8, %s79
    %s81 = ssub.s32 1, %s80
    %s82 = smul.u32 16, %s81
    %p83 = scmp.lt.s32.totalorder %s80, 0
    %s84 = scalar_select %p83, %s80, 0
    %s85 = scalar_lea.vmem %s2, %s84
    %s86 = sadd.s32 0, 0
    %p87 = scmp.lt.s32.totalorder %s86, 0
    %s88 = scalar_select %p87, %s86, 0
    %s89 = smul.u32 8, %s88
    %s90 = ssub.s32 1, %s89
    %s91 = smul.u32 16, %s90
    %s92 = sadd.s32 0, 0
    %p93 = scmp.lt.s32.totalorder %s92, 0
    %s94 = scalar_select %p93, %s92, 0
    %s95 = smul.u32 8, %s94
    %s96 = ssub.s32 1, %s95
    %s97 = smul.u32 16, %s96
    %p98 = scmp.lt.s32.totalorder %s95, 0
    %s99 = scalar_select %p98, %s95, 0
    %s100 = scalar_lea.vmem %s1, %s99
    %s101 = sadd.s32 0, 0
    %p102 = scmp.lt.s32.totalorder %s101, 0
    %s103 = scalar_select %p102, %s101, 0
    %s104 = smul.u32 8, %s103
    %s105 = ssub.s32 1, %s104
    %s106 = smul.u32 16, %s105
    %s107 = sadd.s32 0, 0
    %p108 = scmp.lt.s32.totalorder %s107, 0
    %s109 = scalar_select %p108, %s107, 0
    %s110 = smul.u32 8, %s109
    %s111 = ssub.s32 1, %s110
    %s112 = smul.u32 16, %s111
    %p113 = scmp.lt.s32.totalorder %s110, 0
    %s114 = scalar_select %p113, %s110, 0
    %s115 = scalar_lea.vmem %s2, %s114
    %s116 = sadd.s32 0, 0
    %p117 = scmp.lt.s32.totalorder %s116, 0
    %s118 = scalar_select %p117, %s116, 0
    %s119 = smul.u32 8, %s118
    %s120 = ssub.s32 1, %s119
    %s121 = smul.u32 16, %s120
    %p122 = scmp.eq.s32.totalorder 0, 0
    // Predicated region
    $region18: #{tpu_custom_call.1} parent=1 // pred_check
      %p123 = pneg %p122
    $region19: #{tpu_custom_call.1} parent=1 // pred_check_branch
      %125 = sbr.rel (%p123) target = $region21
    $region20: #{tpu_custom_call.1} parent=1 // pred_region
      %126 = vst [vmem:[#allocation2] sm:$0xff] 0.0
    $region21: #{tpu_custom_call.1} parent=1 // pred_fallthru
      _
    %v127 = vld [vmem:[#allocation3] sm:$0xff]
    %v128 = vld [vmem:[%s100] sm:$0xff]
    %v129 = vmax.f32 %v128, 0.1
    %v130 = vld [vmem:[%s115] sm:$0xff]
    %v131 = vsub.f32 %v130, %v127
    %v132 = vrcp.pop %v129
    %v133 = vmul.f32 %v131, %v132
    %v134 = vmul.f32 %v133, 0.5
    %v135 = vmul.f32 %v134, %v133
    %v136 = vlog2.pop %v129
    %v137 = vmul.f32 %v136, 0.6931472
    %v138 = vadd.f32 %v135, %v137
    %s139 = sadd.s32 0, 0
    %s140 = smul.u32 %s139, 8
    %v141 = vlaneseq
    %v142 = vshrl.u32 %v141, 7
    %v143 = vstv %s140
    %v144 = vadd.s32 %v142, %v143
    %v145 = vlaneseq
    %v146 = vand.u32 %v145, 127
    %vm147 = vcmp.lt.s32.totalorder %v144, 0
    %vm148 = vcmp.eq.s32.totalorder %v144, 0
    %vm149 = vcmp.lt.s32.totalorder %v146, 8
    %vm150 = vmand %vm148, %vm149
    %vm151 = vmor %vm147, %vm150
    %v152 = vsel %vm151, %v138, 0.0
    %v153 = vld [vmem:[#allocation2] sm:$0xff]
    %v154 = vadd.f32 %v152, 0.0
    %v155 = vadd.f32 %v153, %v154
    %156 = vst [vmem:[#allocation2] sm:$0xff] %v155
    // Predicated region
    $region22: #{tpu_custom_call.1} parent=1 // pred_check
      %p157 = pneg %p122
    $region23: #{tpu_custom_call.1} parent=1 // pred_check_branch
      %159 = sbr.rel (%p157) target = $region25
    $region24: #{tpu_custom_call.1} parent=1 // pred_region
      %v160 = vld [vmem:[#allocation2] sm:$0xff]
      %161 = vst [vmem:[#allocation6] sm:$0xff] %v160
    $region25: #{tpu_custom_call.1} parent=1 // pred_fallthru
      _
    // Predicated region
    $region26: #{tpu_custom_call.1} parent=1 // pred_check
      _
    $region27: #{tpu_custom_call.1} parent=1 // pred_check_branch
      %163 = sbr.rel (0) target = $region29
    $region28: #{tpu_custom_call.1} parent=1 // pred_region
      %s165 = ssub.s32 128, 128
      %166 = vsyncadd [#allocation5], %s165
      %s168 = sshll.u32 [#allocation6], 4
      %s169 = int_to_ptr.vmem [resolvable:$true] %s168
      %171 = dma.vmem_to_hbm [thread:$0]  %s169, 128, %s3, [#allocation5]
    $region29: #{tpu_custom_call.1} parent=1 // pred_fallthru
      _
    // Predicated region
    $region30: #{tpu_custom_call.1} parent=1 // pred_check
      _
    $region31: #{tpu_custom_call.1} parent=1 // pred_check_branch
      %173 = sbr.rel (0) target = $region33
    $region32: #{tpu_custom_call.1} parent=1 // pred_region
      %174 = dma.done [#allocation5], 128
    $region33: #{tpu_custom_call.1} parent=1 // pred_fallthru
      _
    %175 = vsyncpa [#allocation4], 1
    %176 = vsyncpa [#allocation5], 1

</llo_original>
